<compile_context>
chip_gen: v7x
topology: tpu7x:2x2x1
jax: 0.10.0
libtpu: 0.0.40
codegen_flags: <defaults>
</compile_context>

<pallas_src>
import functools

import jax
import jax.numpy as jnp
from jax.experimental import pallas as pl
from jax.experimental.pallas import tpu as pltpu


def _hypernet_kernel(x_ref, w_in_ref, b_in_ref, w_out_ref, b_out_ref, o_ref):
    # x_ref    : (B, C, Nz)    batch-major flattened features
    # w_in_ref : (C, Nz, zd)   per-channel linear_in weight (transposed layout)
    # b_in_ref : (C, 1, zd)    per-channel linear_in bias
    # w_out_ref: (zd, Fp)      shared linear_out weight, lane-padded to Fp=128
    # b_out_ref: (1, Fp)       shared linear_out bias, lane-padded
    # o_ref    : (B*C, Fp)     lane- and sublane-dense output (row = b*C + c)
    B, C, _ = x_ref.shape
    x = x_ref[...]                                            # (B, C, Nz)

    # First (per-channel) GEMM, unrolled over the tiny static C.
    # Intermediates stay in vregs and never touch HBM.
    a_list = []
    for c in range(C):
        a_c = jnp.dot(x[:, c, :], w_in_ref[c],
                      preferred_element_type=jnp.float32)     # (B, zd)
        a_list.append(a_c + b_in_ref[c])                      # + (1, zd) bias

    # Interleave rows to batch-major order (row = b*C + c) so the final store
    # is one dense (B*C, Fp) slab and the wrapper needs only a reshape.
    rows = [a_list[c][b:b + 1, :] for b in range(B) for c in range(C)]
    a = jnp.concatenate(rows, axis=0)                         # (B*C, zd)

    # Shared second GEMM, merged across all rows: a single MXU pass/drain.
    k = jnp.dot(a, w_out_ref[...],
                preferred_element_type=jnp.float32)           # (B*C, Fp)
    o_ref[...] = (k + b_out_ref[...]).astype(o_ref.dtype)


def prepare_params(w_in, b_in, w_out, b_out):
    """One-time (per weight update) prep — keep OUT of the per-call hot path.

    Parameter layout (transposed from PyTorch nn.Linear storage):
      w_in : (C, Nz, z_dim)   per-channel linear_in weight
      b_in : (C, z_dim)
      w_out: (z_dim, Fout)    shared linear_out weight
      b_out: (Fout,)
    """
    C, _, z_dim = w_in.shape
    Fout = w_out.shape[-1]
    Fp = ((Fout + 127) // 128) * 128      # pad output features to full lanes
    f32 = jnp.float32
    w_in_p = w_in.astype(f32)
    b_in_p = b_in.astype(f32).reshape(C, 1, z_dim)
    w_out_p = jnp.zeros((z_dim, Fp), f32).at[:, :Fout].set(w_out.astype(f32))
    b_out_p = jnp.zeros((1, Fp), f32).at[:, :Fout].set(b_out.astype(f32))
    return w_in_p, b_in_p, w_out_p, b_out_p


@functools.partial(jax.jit, static_argnames=("out_channels", "f_size"))
def hypernetwork_forward(z, w_in_p, b_in_p, w_out_p, b_out_p, *,
                         out_channels, f_size):
    """z: (B, C, H, W) -> K: (B, C, out_channels, f_size, f_size).

    Takes pre-prepared params from prepare_params() so the hot path contains
    only a free reshape, the Pallas call, and one small slice+reshape.
    """
    B, C, H, W = z.shape
    Nz = H * W
    Fp = w_out_p.shape[-1]
    Fout = out_channels * f_size * f_size

    x = z.reshape(B, C, Nz).astype(jnp.float32)   # contiguous reshape, no transpose

    out = pl.pallas_call(
        _hypernet_kernel,
        out_shape=jax.ShapeDtypeStruct((B * C, Fp), jnp.float32),
        in_specs=[
            pl.BlockSpec(memory_space=pltpu.MemorySpace.VMEM),   # x
            pl.BlockSpec(memory_space=pltpu.MemorySpace.VMEM),   # w_in
            pl.BlockSpec(memory_space=pltpu.MemorySpace.VMEM),   # b_in
            pl.BlockSpec(memory_space=pltpu.MemorySpace.VMEM),   # w_out (padded)
            pl.BlockSpec(memory_space=pltpu.MemorySpace.VMEM),   # b_out (padded)
        ],
        out_specs=pl.BlockSpec(memory_space=pltpu.MemorySpace.VMEM),
    )(x, w_in_p, b_in_p, w_out_p, b_out_p)                       # (B*C, Fp)

    K = out[:, :Fout].reshape(B, C, out_channels, f_size, f_size)
    return K


def _reference_forward(z, w_in, b_in, w_out, b_out, *, out_channels, f_size):
    # Unfused two-matmul reference matching the PyTorch module exactly.
    B, C, H, W = z.shape
    Nz = H * W
    X = z.reshape(B, C, Nz)
    a = jnp.einsum("bcn,cnz->bcz", X, w_in) + b_in[None, :, :]       # (B, C, zd)
    k = jnp.einsum("bcz,zf->bcf", a, w_out) + b_out[None, None, :]   # (B, C, Fout)
    return k.reshape(B, C, out_channels, f_size, f_size)


if __name__ == "__main__":
    # Small shapes consistent with the module's forward (Nz = feature_size**2).
    batch = 2
    in_channels = 4
    feature_size = 16
    z_dim = 32
    out_channels = 1
    f_size = 3

    Nz = feature_size * feature_size
    Fout = out_channels * f_size * f_size

    key = jax.random.PRNGKey(0)
    k_z, k_wi, k_bi, k_wo, k_bo = jax.random.split(key, 5)

    # Deterministic synthetic parameters (PyTorch Linear stores (out,in);
    # here we store the transposed layout used directly by the kernel).
    z = jax.random.normal(k_z, (batch, in_channels, feature_size, feature_size),
                          dtype=jnp.float32)
    w_in = jax.random.normal(k_wi, (in_channels, Nz, z_dim), dtype=jnp.float32) * 0.05
    b_in = jax.random.normal(k_bi, (in_channels, z_dim), dtype=jnp.float32) * 0.05
    w_out = jax.random.normal(k_wo, (z_dim, Fout), dtype=jnp.float32) * 0.05
    b_out = jax.random.normal(k_bo, (Fout,), dtype=jnp.float32) * 0.05

    # Hoisted parameter prep (runs once, not per forward call).
    w_in_p, b_in_p, w_out_p, b_out_p = prepare_params(w_in, b_in, w_out, b_out)
    w_in_p, b_in_p, w_out_p, b_out_p = jax.block_until_ready(
        (w_in_p, b_in_p, w_out_p, b_out_p))

    K = hypernetwork_forward(z, w_in_p, b_in_p, w_out_p, b_out_p,
                             out_channels=out_channels, f_size=f_size)
    K = jax.block_until_ready(K)

    assert K.shape == (batch, in_channels, out_channels, f_size, f_size), K.shape

    K_ref = _reference_forward(z, w_in, b_in, w_out, b_out,
                               out_channels=out_channels, f_size=f_size)
    assert jnp.allclose(K, K_ref, atol=1e-4, rtol=1e-4), \
        float(jnp.max(jnp.abs(K - K_ref)))

    print("KERNEL_OK")
</pallas_src>

<mosaic_0001>
module attributes {stable_mosaic.version = 11 : i64} {
  func.func @_hypernet_kernel(%arg0: memref<2x4x256xf32, #tpu.memory_space<vmem>>, %arg1: memref<4x256x32xf32, #tpu.memory_space<vmem>>, %arg2: memref<4x1x32xf32, #tpu.memory_space<vmem>>, %arg3: memref<32x128xf32, #tpu.memory_space<vmem>>, %arg4: memref<1x128xf32, #tpu.memory_space<vmem>>, %arg5: memref<8x128xf32, #tpu.memory_space<vmem>>) attributes {dimension_semantics = [], scalar_prefetch = 0 : i64, scratch_operands = 0 : i64, tpu.core_type = #tpu.core_type<tc>} {
    %c0 = arith.constant 0 : index
    %c0_0 = arith.constant 0 : index
    %c0_1 = arith.constant 0 : index
    %0 = vector.load %arg0[%c0, %c0_0, %c0_1] : memref<2x4x256xf32, #tpu.memory_space<vmem>>, vector<2x4x256xf32>
    %1 = vector.extract_strided_slice %0 {offsets = [0, 0, 0], sizes = [2, 1, 256], strides = [1, 1, 1]} : vector<2x4x256xf32> to vector<2x1x256xf32>
    %2 = vector.shape_cast %1 : vector<2x1x256xf32> to vector<2x256xf32>
    %c0_2 = arith.constant 0 : index
    %c0_3 = arith.constant 0 : index
    %c0_4 = arith.constant 0 : index
    %3 = vector.load %arg1[%c0_2, %c0_3, %c0_4] : memref<4x256x32xf32, #tpu.memory_space<vmem>>, vector<1x256x32xf32>
    %4 = vector.shape_cast %3 : vector<1x256x32xf32> to vector<256x32xf32>
    %cst = arith.constant dense<0.000000e+00> : vector<2x32xf32>
    %5 = tpu.matmul %2, %4, %cst {dimension_numbers = #tpu.dot_dimension_numbers<[1], [0], [0], [1], [0, 0, 1, 1], [], []>} : vector<2x256xf32>, vector<256x32xf32>, vector<2x32xf32> -> vector<2x32xf32>
    %c0_5 = arith.constant 0 : index
    %c0_6 = arith.constant 0 : index
    %c0_7 = arith.constant 0 : index
    %6 = vector.load %arg2[%c0_5, %c0_6, %c0_7] : memref<4x1x32xf32, #tpu.memory_space<vmem>>, vector<1x1x32xf32>
    %7 = vector.shape_cast %6 : vector<1x1x32xf32> to vector<1x32xf32>
    %8 = vector.broadcast %7 : vector<1x32xf32> to vector<2x32xf32>
    %9 = arith.addf %5, %8 : vector<2x32xf32>
    %10 = vector.extract_strided_slice %0 {offsets = [0, 1, 0], sizes = [2, 1, 256], strides = [1, 1, 1]} : vector<2x4x256xf32> to vector<2x1x256xf32>
    %11 = vector.shape_cast %10 : vector<2x1x256xf32> to vector<2x256xf32>
    %c1 = arith.constant 1 : index
    %c0_8 = arith.constant 0 : index
    %c0_9 = arith.constant 0 : index
    %12 = vector.load %arg1[%c1, %c0_8, %c0_9] : memref<4x256x32xf32, #tpu.memory_space<vmem>>, vector<1x256x32xf32>
    %13 = vector.shape_cast %12 : vector<1x256x32xf32> to vector<256x32xf32>
    %cst_10 = arith.constant dense<0.000000e+00> : vector<2x32xf32>
    %14 = tpu.matmul %11, %13, %cst_10 {dimension_numbers = #tpu.dot_dimension_numbers<[1], [0], [0], [1], [0, 0, 1, 1], [], []>} : vector<2x256xf32>, vector<256x32xf32>, vector<2x32xf32> -> vector<2x32xf32>
    %c1_11 = arith.constant 1 : index
    %c0_12 = arith.constant 0 : index
    %c0_13 = arith.constant 0 : index
    %15 = vector.load %arg2[%c1_11, %c0_12, %c0_13] : memref<4x1x32xf32, #tpu.memory_space<vmem>>, vector<1x1x32xf32>
    %16 = vector.shape_cast %15 : vector<1x1x32xf32> to vector<1x32xf32>
    %17 = vector.broadcast %16 : vector<1x32xf32> to vector<2x32xf32>
    %18 = arith.addf %14, %17 : vector<2x32xf32>
    %19 = vector.extract_strided_slice %0 {offsets = [0, 2, 0], sizes = [2, 1, 256], strides = [1, 1, 1]} : vector<2x4x256xf32> to vector<2x1x256xf32>
    %20 = vector.shape_cast %19 : vector<2x1x256xf32> to vector<2x256xf32>
    %c2 = arith.constant 2 : index
    %c0_14 = arith.constant 0 : index
    %c0_15 = arith.constant 0 : index
    %21 = vector.load %arg1[%c2, %c0_14, %c0_15] : memref<4x256x32xf32, #tpu.memory_space<vmem>>, vector<1x256x32xf32>
    %22 = vector.shape_cast %21 : vector<1x256x32xf32> to vector<256x32xf32>
    %cst_16 = arith.constant dense<0.000000e+00> : vector<2x32xf32>
    %23 = tpu.matmul %20, %22, %cst_16 {dimension_numbers = #tpu.dot_dimension_numbers<[1], [0], [0], [1], [0, 0, 1, 1], [], []>} : vector<2x256xf32>, vector<256x32xf32>, vector<2x32xf32> -> vector<2x32xf32>
    %c2_17 = arith.constant 2 : index
    %c0_18 = arith.constant 0 : index
    %c0_19 = arith.constant 0 : index
    %24 = vector.load %arg2[%c2_17, %c0_18, %c0_19] : memref<4x1x32xf32, #tpu.memory_space<vmem>>, vector<1x1x32xf32>
    %25 = vector.shape_cast %24 : vector<1x1x32xf32> to vector<1x32xf32>
    %26 = vector.broadcast %25 : vector<1x32xf32> to vector<2x32xf32>
    %27 = arith.addf %23, %26 : vector<2x32xf32>
    %28 = vector.extract_strided_slice %0 {offsets = [0, 3, 0], sizes = [2, 1, 256], strides = [1, 1, 1]} : vector<2x4x256xf32> to vector<2x1x256xf32>
    %29 = vector.shape_cast %28 : vector<2x1x256xf32> to vector<2x256xf32>
    %c3 = arith.constant 3 : index
    %c0_20 = arith.constant 0 : index
    %c0_21 = arith.constant 0 : index
    %30 = vector.load %arg1[%c3, %c0_20, %c0_21] : memref<4x256x32xf32, #tpu.memory_space<vmem>>, vector<1x256x32xf32>
    %31 = vector.shape_cast %30 : vector<1x256x32xf32> to vector<256x32xf32>
    %cst_22 = arith.constant dense<0.000000e+00> : vector<2x32xf32>
    %32 = tpu.matmul %29, %31, %cst_22 {dimension_numbers = #tpu.dot_dimension_numbers<[1], [0], [0], [1], [0, 0, 1, 1], [], []>} : vector<2x256xf32>, vector<256x32xf32>, vector<2x32xf32> -> vector<2x32xf32>
    %c3_23 = arith.constant 3 : index
    %c0_24 = arith.constant 0 : index
    %c0_25 = arith.constant 0 : index
    %33 = vector.load %arg2[%c3_23, %c0_24, %c0_25] : memref<4x1x32xf32, #tpu.memory_space<vmem>>, vector<1x1x32xf32>
    %34 = vector.shape_cast %33 : vector<1x1x32xf32> to vector<1x32xf32>
    %35 = vector.broadcast %34 : vector<1x32xf32> to vector<2x32xf32>
    %36 = arith.addf %32, %35 : vector<2x32xf32>
    %37 = vector.extract_strided_slice %9 {offsets = [0, 0], sizes = [1, 32], strides = [1, 1]} : vector<2x32xf32> to vector<1x32xf32>
    %38 = vector.extract_strided_slice %18 {offsets = [0, 0], sizes = [1, 32], strides = [1, 1]} : vector<2x32xf32> to vector<1x32xf32>
    %39 = vector.extract_strided_slice %27 {offsets = [0, 0], sizes = [1, 32], strides = [1, 1]} : vector<2x32xf32> to vector<1x32xf32>
    %40 = vector.extract_strided_slice %36 {offsets = [0, 0], sizes = [1, 32], strides = [1, 1]} : vector<2x32xf32> to vector<1x32xf32>
    %41 = vector.extract_strided_slice %9 {offsets = [1, 0], sizes = [1, 32], strides = [1, 1]} : vector<2x32xf32> to vector<1x32xf32>
    %42 = vector.extract_strided_slice %18 {offsets = [1, 0], sizes = [1, 32], strides = [1, 1]} : vector<2x32xf32> to vector<1x32xf32>
    %43 = vector.extract_strided_slice %27 {offsets = [1, 0], sizes = [1, 32], strides = [1, 1]} : vector<2x32xf32> to vector<1x32xf32>
    %44 = vector.extract_strided_slice %36 {offsets = [1, 0], sizes = [1, 32], strides = [1, 1]} : vector<2x32xf32> to vector<1x32xf32>
    %45 = tpu.concatenate %37, %38, %39, %40, %41, %42, %43, %44 in 0 : vector<1x32xf32>, vector<1x32xf32>, vector<1x32xf32>, vector<1x32xf32>, vector<1x32xf32>, vector<1x32xf32>, vector<1x32xf32>, vector<1x32xf32> -> vector<8x32xf32>
    %c0_26 = arith.constant 0 : index
    %c0_27 = arith.constant 0 : index
    %46 = vector.load %arg3[%c0_26, %c0_27] : memref<32x128xf32, #tpu.memory_space<vmem>>, vector<32x128xf32>
    %cst_28 = arith.constant dense<0.000000e+00> : vector<8x128xf32>
    %47 = tpu.matmul %45, %46, %cst_28 {dimension_numbers = #tpu.dot_dimension_numbers<[1], [0], [0], [1], [0, 0, 1, 1], [], []>} : vector<8x32xf32>, vector<32x128xf32>, vector<8x128xf32> -> vector<8x128xf32>
    %c0_29 = arith.constant 0 : index
    %c0_30 = arith.constant 0 : index
    %48 = vector.load %arg4[%c0_29, %c0_30] : memref<1x128xf32, #tpu.memory_space<vmem>>, vector<1x128xf32>
    %49 = vector.broadcast %48 : vector<1x128xf32> to vector<8x128xf32>
    %50 = arith.addf %47, %49 : vector<8x128xf32>
    %c0_31 = arith.constant 0 : index
    %c0_32 = arith.constant 0 : index
    %51 = vector.load %arg5[%c0_31, %c0_32] : memref<8x128xf32, #tpu.memory_space<vmem>>, vector<8x128xf32>
    tpu.vector_store %arg5[%c0_31, %c0_32], %50 {strides = array<i32>} : memref<8x128xf32, #tpu.memory_space<vmem>>, vector<8x128xf32>,
    return
  }
}

</mosaic_0001>

<llo_original>
// kernel: hypernetwork_forward.1
$region0: #{hypernetwork_forward.1}
  #allocation0 [shape = 'u32[]', space=smem, size = 0x4, offset = 0x4, fixed_abs, tag = 'smem constant byte address 0x4 - core index']
  #allocation1 [shape = 'u32[144,128]{1,0:T(1,128)}', space=vmem, size = 0x12000, scoped, tag = 'internal scratch']
  %s0 = inlined_call_operand.vmem [shape: f32[2,4,256], index: 0, kind: input, shape index: {}]
  %s1 = inlined_call_operand.vmem [shape: f32[4,256,32], index: 1, kind: input, shape index: {}]
  %s2 = inlined_call_operand.vmem [shape: f32[4,1,32], index: 2, kind: input, shape index: {}]
  %s3 = inlined_call_operand.vmem [shape: f32[32,128], index: 3, kind: input, shape index: {}]
  %s4 = inlined_call_operand.vmem [shape: f32[1,128], index: 4, kind: input, shape index: {}]
  %s5 = inlined_call_operand.vmem [shape: f32[8,128], index: 5, kind: output, shape index: {}]
  %s6 = sld [smem:[#allocation0]]
  $region30: #{hypernetwork_forward.1} parent=0
    _
  %s8 = ssub.s32 1, %s6
  %s9 = scalar_select 0, %s8, %s6
  // Predicated region
  $region2: #{hypernetwork_forward.1} parent=0 // pred_check
    _
  $region3: #{hypernetwork_forward.1} parent=0 // pred_check_branch
    %11 = sbr.rel (0) target = $region5
  $region4: #{hypernetwork_forward.1} parent=0 // pred_region
    _
  $region5: #{hypernetwork_forward.1} parent=0 // pred_fallthru
    _
  // Predicated region
  $region6: #{hypernetwork_forward.1} parent=0 // pred_check
    _
  $region7: #{hypernetwork_forward.1} parent=0 // pred_check_branch
    %13 = sbr.rel (0) target = $region9
  $region8: #{hypernetwork_forward.1} parent=0 // pred_region
    _
  $region9: #{hypernetwork_forward.1} parent=0 // pred_fallthru
    _
  // Predicated region
  $region10: #{hypernetwork_forward.1} parent=0 // pred_check
    _
  $region11: #{hypernetwork_forward.1} parent=0 // pred_check_branch
    %15 = sbr.rel (0) target = $region13
  $region12: #{hypernetwork_forward.1} parent=0 // pred_region
    _
  $region13: #{hypernetwork_forward.1} parent=0 // pred_fallthru
    _
  // Predicated region
  $region14: #{hypernetwork_forward.1} parent=0 // pred_check
    _
  $region15: #{hypernetwork_forward.1} parent=0 // pred_check_branch
    %17 = sbr.rel (0) target = $region17
  $region16: #{hypernetwork_forward.1} parent=0 // pred_region
    _
  $region17: #{hypernetwork_forward.1} parent=0 // pred_fallthru
    _
  // Predicated region
  $region18: #{hypernetwork_forward.1} parent=0 // pred_check
    _
  $region19: #{hypernetwork_forward.1} parent=0 // pred_check_branch
    %19 = sbr.rel (0) target = $region21
  $region20: #{hypernetwork_forward.1} parent=0 // pred_region
    _
  $region21: #{hypernetwork_forward.1} parent=0 // pred_fallthru
    _
  %v20 = vld [vmem:[%s0] sm:$0xff]
  %v21 = vld [vmem:[%s0 + $0x8] sm:$0xff]
  %v22 = vld [vmem:[%s1] sm:$0xff]
  %v23 = vld [vmem:[%s1 + $0x8] sm:$0xff]
  %v24 = vld [vmem:[%s1 + $0x10] sm:$0xff]
  %v25 = vld [vmem:[%s1 + $0x18] sm:$0xff]
  %v26 = vld [vmem:[%s1 + $0x20] sm:$0xff]
  %v27 = vld [vmem:[%s1 + $0x28] sm:$0xff]
  %v28 = vld [vmem:[%s1 + $0x30] sm:$0xff]
  %v29 = vld [vmem:[%s1 + $0x38] sm:$0xff]
  %v30 = vld [vmem:[%s1 + $0x40] sm:$0xff]
  %v31 = vld [vmem:[%s1 + $0x48] sm:$0xff]
  %v32 = vld [vmem:[%s1 + $0x50] sm:$0xff]
  %v33 = vld [vmem:[%s1 + $0x58] sm:$0xff]
  %v34 = vld [vmem:[%s1 + $0x60] sm:$0xff]
  %v35 = vld [vmem:[%s1 + $0x68] sm:$0xff]
  %v36 = vld [vmem:[%s1 + $0x70] sm:$0xff]
  %v37 = vld [vmem:[%s1 + $0x78] sm:$0xff]
  %v38 = vld [vmem:[%s1 + $0x80] sm:$0xff]
  %v39 = vld [vmem:[%s1 + $0x88] sm:$0xff]
  %v40 = vld [vmem:[%s1 + $0x90] sm:$0xff]
  %v41 = vld [vmem:[%s1 + $0x98] sm:$0xff]
  %v42 = vld [vmem:[%s1 + $0xa0] sm:$0xff]
  %v43 = vld [vmem:[%s1 + $0xa8] sm:$0xff]
  %v44 = vld [vmem:[%s1 + $0xb0] sm:$0xff]
  %v45 = vld [vmem:[%s1 + $0xb8] sm:$0xff]
  %v46 = vld [vmem:[%s1 + $0xc0] sm:$0xff]
  %v47 = vld [vmem:[%s1 + $0xc8] sm:$0xff]
  %v48 = vld [vmem:[%s1 + $0xd0] sm:$0xff]
  %v49 = vld [vmem:[%s1 + $0xd8] sm:$0xff]
  %v50 = vld [vmem:[%s1 + $0xe0] sm:$0xff]
  %v51 = vld [vmem:[%s1 + $0xe8] sm:$0xff]
  %v52 = vld [vmem:[%s1 + $0xf0] sm:$0xff]
  %v53 = vld [vmem:[%s1 + $0xf8] sm:$0xff]
  %v54 = vld [vmem:[%s2] sm:$0x1]
  %v56 = vlaneseq
  %v57 = vshrl.u32 %v56, 7
  %v58 = vsub.s32 0, %v57
  %v59 = vrot.slane %v54, %v58
  %v63 = vlaneseq
  %v64 = vshrl.u32 %v63, 7
  %v65 = vsub.s32 0, %v64
  %v66 = vrot.slane %v20, %v65
  %v67 = vlaneseq
  %v68 = vshrl.u32 %v67, 7
  %v69 = vsub.s32 4, %v68
  %v70 = vrot.slane %v20, %v69
  %v71 = vlaneseq
  %v72 = vshrl.u32 %v71, 7
  %v73 = vsub.s32 0, %v72
  %v74 = vrot.slane %v21, %v73
  %v75 = vlaneseq
  %v76 = vshrl.u32 %v75, 7
  %v77 = vsub.s32 4, %v76
  %v78 = vrot.slane %v21, %v77
  %vm79 = vcmask 1041409
  %v80 = vsel %vm79, %v74, %v66
  %v81 = vsel %vm79, %v78, %v70
  %84 = vmatprep.subr.mxu0 0.0
  %85 = vmatpush1.msra.mxu0 %v22
  %86 = vmatprep.subr.mxu0 0.0
  %87 = vmatpush1.msra.mxu0 %v23
  %88 = vmatprep.subr.mxu0 0.0
  %89 = vmatpush1.msra.mxu0 %v24
  %90 = vmatprep.subr.mxu0 0.0
  %91 = vmatpush1.msra.mxu0 %v25
  %92 = vmatprep.subr.mxu0 0.0
  %93 = vmatpush1.msra.mxu0 %v26
  %94 = vmatprep.subr.mxu0 0.0
  %95 = vmatpush1.msra.mxu0 %v27
  %96 = vmatprep.subr.mxu0 0.0
  %97 = vmatpush1.msra.mxu0 %v28
  %98 = vmatprep.subr.mxu0 0.0
  %99 = vmatpush1.msra.mxu0 %v29
  %100 = vmatprep.subr.mxu0 0.0
  %101 = vmatpush1.msra.mxu0 %v30
  %102 = vmatprep.subr.mxu0 0.0
  %103 = vmatpush1.msra.mxu0 %v31
  %104 = vmatprep.subr.mxu0 0.0
  %105 = vmatpush1.msra.mxu0 %v32
  %106 = vmatprep.subr.mxu0 0.0
  %107 = vmatpush1.msra.mxu0 %v33
  %108 = vmatprep.subr.mxu0 0.0
  %109 = vmatpush1.msra.mxu0 %v34
  %110 = vmatprep.subr.mxu0 0.0
  %111 = vmatpush1.msra.mxu0 %v35
  %112 = vmatprep.subr.mxu0 0.0
  %113 = vmatpush1.msra.mxu0 %v36
  %114 = vmatprep.subr.mxu0 0.0
  %115 = vmatpush1.msra.mxu0 %v37
  %116 = vmatprep.subr.mxu0 0.0
  %117 = vmatpush1.msra.mxu0 %v38
  %118 = vmatprep.subr.mxu0 0.0
  %119 = vmatpush1.msra.mxu0 %v39
  %120 = vmatprep.subr.mxu0 0.0
  %121 = vmatpush1.msra.mxu0 %v40
  %122 = vmatprep.subr.mxu0 0.0
  %123 = vmatpush1.msra.mxu0 %v41
  %124 = vmatprep.subr.mxu0 0.0
  %125 = vmatpush1.msra.mxu0 %v42
  %126 = vmatprep.subr.mxu0 0.0
  %127 = vmatpush1.msra.mxu0 %v43
  %128 = vmatprep.subr.mxu0 0.0
  %129 = vmatpush1.msra.mxu0 %v44
  %130 = vmatprep.subr.mxu0 0.0
  %131 = vmatpush1.msra.mxu0 %v45
  %132 = vmatprep.subr.mxu0 0.0
  %133 = vmatpush1.msra.mxu0 %v46
  %134 = vmatprep.subr.mxu0 0.0
  %135 = vmatpush1.msra.mxu0 %v47
  %136 = vmatprep.subr.mxu0 0.0
  %137 = vmatpush1.msra.mxu0 %v48
  %138 = vmatprep.subr.mxu0 0.0
  %139 = vmatpush1.msra.mxu0 %v49
  %140 = vmatprep.subr.mxu0 0.0
  %141 = vmatpush1.msra.mxu0 %v50
  %142 = vmatprep.subr.mxu0 0.0
  %143 = vmatpush1.msra.mxu0 %v51
  %144 = vmatprep.subr.mxu0 0.0
  %145 = vmatpush1.msra.mxu0 %v52
  %146 = vmatprep.subr.mxu0 0.0
  %147 = vmatpush1.msra.mxu0 %v53
  %148 = vmatprep.mubr.f32.mxu0 %v81
  %149 = vmatmul.mubr.f32.gmra.mrb[0].mxu0 %v80
  %v150 = vpop.f32.mrb[0].mxu0
  %v151 = vadd.f32 %v59, %v150
  %v152 = vpop.f32.mrb[0].mxu0
  %153 = vdwg.mxu0
  %s154 = scalar_lea.vmem %s1, 256
  %v155 = vld [vmem:[%s154] sm:$0xff]
  %v156 = vld [vmem:[%s154 + $0x8] sm:$0xff]
  %v157 = vld [vmem:[%s154 + $0x10] sm:$0xff]
  %v158 = vld [vmem:[%s154 + $0x18] sm:$0xff]
  %v159 = vld [vmem:[%s154 + $0x20] sm:$0xff]
  %v160 = vld [vmem:[%s154 + $0x28] sm:$0xff]
  %v161 = vld [vmem:[%s154 + $0x30] sm:$0xff]
  %v162 = vld [vmem:[%s154 + $0x38] sm:$0xff]
  %v163 = vld [vmem:[%s154 + $0x40] sm:$0xff]
  %v164 = vld [vmem:[%s154 + $0x48] sm:$0xff]
  %v165 = vld [vmem:[%s154 + $0x50] sm:$0xff]
  %v166 = vld [vmem:[%s154 + $0x58] sm:$0xff]
  %v167 = vld [vmem:[%s154 + $0x60] sm:$0xff]
  %v168 = vld [vmem:[%s154 + $0x68] sm:$0xff]
  %v169 = vld [vmem:[%s154 + $0x70] sm:$0xff]
  %v170 = vld [vmem:[%s154 + $0x78] sm:$0xff]
  %v171 = vld [vmem:[%s154 + $0x80] sm:$0xff]
  %v172 = vld [vmem:[%s154 + $0x88] sm:$0xff]
  %v173 = vld [vmem:[%s154 + $0x90] sm:$0xff]
  %v174 = vld [vmem:[%s154 + $0x98] sm:$0xff]
  %v175 = vld [vmem:[%s154 + $0xa0] sm:$0xff]
  %v176 = vld [vmem:[%s154 + $0xa8] sm:$0xff]
  %v177 = vld [vmem:[%s154 + $0xb0] sm:$0xff]
  %v178 = vld [vmem:[%s154 + $0xb8] sm:$0xff]
  %v179 = vld [vmem:[%s154 + $0xc0] sm:$0xff]
  %v180 = vld [vmem:[%s154 + $0xc8] sm:$0xff]
  %v181 = vld [vmem:[%s154 + $0xd0] sm:$0xff]
  %v182 = vld [vmem:[%s154 + $0xd8] sm:$0xff]
  %v183 = vld [vmem:[%s154 + $0xe0] sm:$0xff]
  %v184 = vld [vmem:[%s154 + $0xe8] sm:$0xff]
  %v185 = vld [vmem:[%s154 + $0xf0] sm:$0xff]
  %v186 = vld [vmem:[%s154 + $0xf8] sm:$0xff]
  %s187 = scalar_lea.vmem %s2, 1
  %v188 = vld [vmem:[%s187] sm:$0x1]
  %v190 = vlaneseq
  %v191 = vshrl.u32 %v190, 7
  %v192 = vsub.s32 0, %v191
  %v193 = vrot.slane %v188, %v192
  %v195 = vlaneseq
  %v196 = vshrl.u32 %v195, 7
  %v197 = vsub.s32 1, %v196
  %v198 = vrot.slane %v20, %v197
  %v199 = vlaneseq
  %v200 = vshrl.u32 %v199, 7
  %v201 = vsub.s32 5, %v200
  %v202 = vrot.slane %v20, %v201
  %v203 = vlaneseq
  %v204 = vshrl.u32 %v203, 7
  %v205 = vsub.s32 1, %v204
  %v206 = vrot.slane %v21, %v205
  %v207 = vlaneseq
  %v208 = vshrl.u32 %v207, 7
  %v209 = vsub.s32 5, %v208
  %v210 = vrot.slane %v21, %v209
  %v211 = vsel %vm79, %v206, %v198
  %v212 = vsel %vm79, %v210, %v202
  %215 = vmatprep.subr.mxu0 0.0
  %216 = vmatpush1.msra.mxu0 %v155
  %217 = vmatprep.subr.mxu0 0.0
  %218 = vmatpush1.msra.mxu0 %v156
  %219 = vmatprep.subr.mxu0 0.0
  %220 = vmatpush1.msra.mxu0 %v157
  %221 = vmatprep.subr.mxu0 0.0
  %222 = vmatpush1.msra.mxu0 %v158
  %223 = vmatprep.subr.mxu0 0.0
  %224 = vmatpush1.msra.mxu0 %v159
  %225 = vmatprep.subr.mxu0 0.0
  %226 = vmatpush1.msra.mxu0 %v160
  %227 = vmatprep.subr.mxu0 0.0
  %228 = vmatpush1.msra.mxu0 %v161
  %229 = vmatprep.subr.mxu0 0.0
  %230 = vmatpush1.msra.mxu0 %v162
  %231 = vmatprep.subr.mxu0 0.0
  %232 = vmatpush1.msra.mxu0 %v163
  %233 = vmatprep.subr.mxu0 0.0
  %234 = vmatpush1.msra.mxu0 %v164
  %235 = vmatprep.subr.mxu0 0.0
  %236 = vmatpush1.msra.mxu0 %v165
  %237 = vmatprep.subr.mxu0 0.0
  %238 = vmatpush1.msra.mxu0 %v166
  %239 = vmatprep.subr.mxu0 0.0
  %240 = vmatpush1.msra.mxu0 %v167
  %241 = vmatprep.subr.mxu0 0.0
  %242 = vmatpush1.msra.mxu0 %v168
  %243 = vmatprep.subr.mxu0 0.0
  %244 = vmatpush1.msra.mxu0 %v169
  %245 = vmatprep.subr.mxu0 0.0
  %246 = vmatpush1.msra.mxu0 %v170
  %247 = vmatprep.subr.mxu0 0.0
  %248 = vmatpush1.msra.mxu0 %v171
  %249 = vmatprep.subr.mxu0 0.0
  %250 = vmatpush1.msra.mxu0 %v172
  %251 = vmatprep.subr.mxu0 0.0
  %252 = vmatpush1.msra.mxu0 %v173
  %253 = vmatprep.subr.mxu0 0.0
  %254 = vmatpush1.msra.mxu0 %v174
  %255 = vmatprep.subr.mxu0 0.0
  %256 = vmatpush1.msra.mxu0 %v175
  %257 = vmatprep.subr.mxu0 0.0
  %258 = vmatpush1.msra.mxu0 %v176
  %259 = vmatprep.subr.mxu0 0.0
  %260 = vmatpush1.msra.mxu0 %v177
  %261 = vmatprep.subr.mxu0 0.0
  %262 = vmatpush1.msra.mxu0 %v178
  %263 = vmatprep.subr.mxu0 0.0
  %264 = vmatpush1.msra.mxu0 %v179
  %265 = vmatprep.subr.mxu0 0.0
  %266 = vmatpush1.msra.mxu0 %v180
  %267 = vmatprep.subr.mxu0 0.0
  %268 = vmatpush1.msra.mxu0 %v181
  %269 = vmatprep.subr.mxu0 0.0
  %270 = vmatpush1.msra.mxu0 %v182
  %271 = vmatprep.subr.mxu0 0.0
  %272 = vmatpush1.msra.mxu0 %v183
  %273 = vmatprep.subr.mxu0 0.0
  %274 = vmatpush1.msra.mxu0 %v184
  %275 = vmatprep.subr.mxu0 0.0
  %276 = vmatpush1.msra.mxu0 %v185
  %277 = vmatprep.subr.mxu0 0.0
  %278 = vmatpush1.msra.mxu0 %v186
  %279 = vmatprep.mubr.f32.mxu0 %v212
  %280 = vmatmul.mubr.f32.gmra.mrb[0].mxu0 %v211
  %v281 = vpop.f32.mrb[0].mxu0
  %v282 = vadd.f32 %v193, %v281
  %v283 = vpop.f32.mrb[0].mxu0
  %284 = vdwg.mxu0
  %s285 = scalar_lea.vmem %s1, 512
  %v286 = vld [vmem:[%s285] sm:$0xff]
  %v287 = vld [vmem:[%s285 + $0x8] sm:$0xff]
  %v288 = vld [vmem:[%s285 + $0x10] sm:$0xff]
  %v289 = vld [vmem:[%s285 + $0x18] sm:$0xff]
  %v290 = vld [vmem:[%s285 + $0x20] sm:$0xff]
  %v291 = vld [vmem:[%s285 + $0x28] sm:$0xff]
  %v292 = vld [vmem:[%s285 + $0x30] sm:$0xff]
  %v293 = vld [vmem:[%s285 + $0x38] sm:$0xff]
  %v294 = vld [vmem:[%s285 + $0x40] sm:$0xff]
  %v295 = vld [vmem:[%s285 + $0x48] sm:$0xff]
  %v296 = vld [vmem:[%s285 + $0x50] sm:$0xff]
  %v297 = vld [vmem:[%s285 + $0x58] sm:$0xff]
  %v298 = vld [vmem:[%s285 + $0x60] sm:$0xff]
  %v299 = vld [vmem:[%s285 + $0x68] sm:$0xff]
  %v300 = vld [vmem:[%s285 + $0x70] sm:$0xff]
  %v301 = vld [vmem:[%s285 + $0x78] sm:$0xff]
  %v302 = vld [vmem:[%s285 + $0x80] sm:$0xff]
  %v303 = vld [vmem:[%s285 + $0x88] sm:$0xff]
  %v304 = vld [vmem:[%s285 + $0x90] sm:$0xff]
  %v305 = vld [vmem:[%s285 + $0x98] sm:$0xff]
  %v306 = vld [vmem:[%s285 + $0xa0] sm:$0xff]
  %v307 = vld [vmem:[%s285 + $0xa8] sm:$0xff]
  %v308 = vld [vmem:[%s285 + $0xb0] sm:$0xff]
  %v309 = vld [vmem:[%s285 + $0xb8] sm:$0xff]
  %v310 = vld [vmem:[%s285 + $0xc0] sm:$0xff]
  %v311 = vld [vmem:[%s285 + $0xc8] sm:$0xff]
  %v312 = vld [vmem:[%s285 + $0xd0] sm:$0xff]
  %v313 = vld [vmem:[%s285 + $0xd8] sm:$0xff]
  %v314 = vld [vmem:[%s285 + $0xe0] sm:$0xff]
  %v315 = vld [vmem:[%s285 + $0xe8] sm:$0xff]
  %v316 = vld [vmem:[%s285 + $0xf0] sm:$0xff]
  %v317 = vld [vmem:[%s285 + $0xf8] sm:$0xff]
  %s318 = scalar_lea.vmem %s2, 2
  %v319 = vld [vmem:[%s318] sm:$0x1]
  %v321 = vlaneseq
  %v322 = vshrl.u32 %v321, 7
  %v323 = vsub.s32 0, %v322
  %v324 = vrot.slane %v319, %v323
  %v326 = vlaneseq
  %v327 = vshrl.u32 %v326, 7
  %v328 = vsub.s32 2, %v327
  %v329 = vrot.slane %v20, %v328
  %v330 = vlaneseq
  %v331 = vshrl.u32 %v330, 7
  %v332 = vsub.s32 6, %v331
  %v333 = vrot.slane %v20, %v332
  %v334 = vlaneseq
  %v335 = vshrl.u32 %v334, 7
  %v336 = vsub.s32 2, %v335
  %v337 = vrot.slane %v21, %v336
  %v338 = vlaneseq
  %v339 = vshrl.u32 %v338, 7
  %v340 = vsub.s32 6, %v339
  %v341 = vrot.slane %v21, %v340
  %v342 = vsel %vm79, %v337, %v329
  %v343 = vsel %vm79, %v341, %v333
  %346 = vmatprep.subr.mxu0 0.0
  %347 = vmatpush1.msra.mxu0 %v286
  %348 = vmatprep.subr.mxu0 0.0
  %349 = vmatpush1.msra.mxu0 %v287
  %350 = vmatprep.subr.mxu0 0.0
  %351 = vmatpush1.msra.mxu0 %v288
  %352 = vmatprep.subr.mxu0 0.0
  %353 = vmatpush1.msra.mxu0 %v289
  %354 = vmatprep.subr.mxu0 0.0
  %355 = vmatpush1.msra.mxu0 %v290
  %356 = vmatprep.subr.mxu0 0.0
  %357 = vmatpush1.msra.mxu0 %v291
  %358 = vmatprep.subr.mxu0 0.0
  %359 = vmatpush1.msra.mxu0 %v292
  %360 = vmatprep.subr.mxu0 0.0
  %361 = vmatpush1.msra.mxu0 %v293
  %362 = vmatprep.subr.mxu0 0.0
  %363 = vmatpush1.msra.mxu0 %v294
  %364 = vmatprep.subr.mxu0 0.0
  %365 = vmatpush1.msra.mxu0 %v295
  %366 = vmatprep.subr.mxu0 0.0
  %367 = vmatpush1.msra.mxu0 %v296
  %368 = vmatprep.subr.mxu0 0.0
  %369 = vmatpush1.msra.mxu0 %v297
  %370 = vmatprep.subr.mxu0 0.0
  %371 = vmatpush1.msra.mxu0 %v298
  %372 = vmatprep.subr.mxu0 0.0
  %373 = vmatpush1.msra.mxu0 %v299
  %374 = vmatprep.subr.mxu0 0.0
  %375 = vmatpush1.msra.mxu0 %v300
  %376 = vmatprep.subr.mxu0 0.0
  %377 = vmatpush1.msra.mxu0 %v301
  %378 = vmatprep.subr.mxu0 0.0
  %379 = vmatpush1.msra.mxu0 %v302
  %380 = vmatprep.subr.mxu0 0.0
  %381 = vmatpush1.msra.mxu0 %v303
  %382 = vmatprep.subr.mxu0 0.0
  %383 = vmatpush1.msra.mxu0 %v304
  %384 = vmatprep.subr.mxu0 0.0
  %385 = vmatpush1.msra.mxu0 %v305
  %386 = vmatprep.subr.mxu0 0.0
  %387 = vmatpush1.msra.mxu0 %v306
  %388 = vmatprep.subr.mxu0 0.0
  %389 = vmatpush1.msra.mxu0 %v307
  %390 = vmatprep.subr.mxu0 0.0
  %391 = vmatpush1.msra.mxu0 %v308
  %392 = vmatprep.subr.mxu0 0.0
  %393 = vmatpush1.msra.mxu0 %v309
  %394 = vmatprep.subr.mxu0 0.0
  %395 = vmatpush1.msra.mxu0 %v310
  %396 = vmatprep.subr.mxu0 0.0
  %397 = vmatpush1.msra.mxu0 %v311
  %398 = vmatprep.subr.mxu0 0.0
  %399 = vmatpush1.msra.mxu0 %v312
  %400 = vmatprep.subr.mxu0 0.0
  %401 = vmatpush1.msra.mxu0 %v313
  %402 = vmatprep.subr.mxu0 0.0
  %403 = vmatpush1.msra.mxu0 %v314
  %404 = vmatprep.subr.mxu0 0.0
  %405 = vmatpush1.msra.mxu0 %v315
  %406 = vmatprep.subr.mxu0 0.0
  %407 = vmatpush1.msra.mxu0 %v316
  %408 = vmatprep.subr.mxu0 0.0
  %409 = vmatpush1.msra.mxu0 %v317
  %410 = vmatprep.mubr.f32.mxu0 %v343
  %411 = vmatmul.mubr.f32.gmra.mrb[0].mxu0 %v342
  %v412 = vpop.f32.mrb[0].mxu0
  %v413 = vadd.f32 %v324, %v412
  %v414 = vpop.f32.mrb[0].mxu0
  %415 = vdwg.mxu0
  %s416 = scalar_lea.vmem %s1, 768
  %v417 = vld [vmem:[%s416] sm:$0xff]
  %v418 = vld [vmem:[%s416 + $0x8] sm:$0xff]
  %v419 = vld [vmem:[%s416 + $0x10] sm:$0xff]
  %v420 = vld [vmem:[%s416 + $0x18] sm:$0xff]
  %v421 = vld [vmem:[%s416 + $0x20] sm:$0xff]
  %v422 = vld [vmem:[%s416 + $0x28] sm:$0xff]
  %v423 = vld [vmem:[%s416 + $0x30] sm:$0xff]
  %v424 = vld [vmem:[%s416 + $0x38] sm:$0xff]
  %v425 = vld [vmem:[%s416 + $0x40] sm:$0xff]
  %v426 = vld [vmem:[%s416 + $0x48] sm:$0xff]
  %v427 = vld [vmem:[%s416 + $0x50] sm:$0xff]
  %v428 = vld [vmem:[%s416 + $0x58] sm:$0xff]
  %v429 = vld [vmem:[%s416 + $0x60] sm:$0xff]
  %v430 = vld [vmem:[%s416 + $0x68] sm:$0xff]
  %v431 = vld [vmem:[%s416 + $0x70] sm:$0xff]
  %v432 = vld [vmem:[%s416 + $0x78] sm:$0xff]
  %v433 = vld [vmem:[%s416 + $0x80] sm:$0xff]
  %v434 = vld [vmem:[%s416 + $0x88] sm:$0xff]
  %v435 = vld [vmem:[%s416 + $0x90] sm:$0xff]
  %v436 = vld [vmem:[%s416 + $0x98] sm:$0xff]
  %v437 = vld [vmem:[%s416 + $0xa0] sm:$0xff]
  %v438 = vld [vmem:[%s416 + $0xa8] sm:$0xff]
  %v439 = vld [vmem:[%s416 + $0xb0] sm:$0xff]
  %v440 = vld [vmem:[%s416 + $0xb8] sm:$0xff]
  %v441 = vld [vmem:[%s416 + $0xc0] sm:$0xff]
  %v442 = vld [vmem:[%s416 + $0xc8] sm:$0xff]
  %v443 = vld [vmem:[%s416 + $0xd0] sm:$0xff]
  %v444 = vld [vmem:[%s416 + $0xd8] sm:$0xff]
  %v445 = vld [vmem:[%s416 + $0xe0] sm:$0xff]
  %v446 = vld [vmem:[%s416 + $0xe8] sm:$0xff]
  %v447 = vld [vmem:[%s416 + $0xf0] sm:$0xff]
  %v448 = vld [vmem:[%s416 + $0xf8] sm:$0xff]
  %s449 = scalar_lea.vmem %s2, 3
  %v450 = vld [vmem:[%s449] sm:$0x1]
  %v452 = vlaneseq
  %v453 = vshrl.u32 %v452, 7
  %v454 = vsub.s32 0, %v453
  %v455 = vrot.slane %v450, %v454
  %v457 = vlaneseq
  %v458 = vshrl.u32 %v457, 7
  %v459 = vsub.s32 3, %v458
  %v460 = vrot.slane %v20, %v459
  %v461 = vlaneseq
  %v462 = vshrl.u32 %v461, 7
  %v463 = vsub.s32 7, %v462
  %v464 = vrot.slane %v20, %v463
  %v465 = vlaneseq
  %v466 = vshrl.u32 %v465, 7
  %v467 = vsub.s32 3, %v466
  %v468 = vrot.slane %v21, %v467
  %v469 = vlaneseq
  %v470 = vshrl.u32 %v469, 7
  %v471 = vsub.s32 7, %v470
  %v472 = vrot.slane %v21, %v471
  %v473 = vsel %vm79, %v468, %v460
  %v474 = vsel %vm79, %v472, %v464
  %477 = vmatprep.subr.mxu0 0.0
  %478 = vmatpush1.msra.mxu0 %v417
  %479 = vmatprep.subr.mxu0 0.0
  %480 = vmatpush1.msra.mxu0 %v418
  %481 = vmatprep.subr.mxu0 0.0
  %482 = vmatpush1.msra.mxu0 %v419
  %483 = vmatprep.subr.mxu0 0.0
  %484 = vmatpush1.msra.mxu0 %v420
  %485 = vmatprep.subr.mxu0 0.0
  %486 = vmatpush1.msra.mxu0 %v421
  %487 = vmatprep.subr.mxu0 0.0
  %488 = vmatpush1.msra.mxu0 %v422
  %489 = vmatprep.subr.mxu0 0.0
  %490 = vmatpush1.msra.mxu0 %v423
  %491 = vmatprep.subr.mxu0 0.0
  %492 = vmatpush1.msra.mxu0 %v424
  %493 = vmatprep.subr.mxu0 0.0
  %494 = vmatpush1.msra.mxu0 %v425
  %495 = vmatprep.subr.mxu0 0.0
  %496 = vmatpush1.msra.mxu0 %v426
  %497 = vmatprep.subr.mxu0 0.0
  %498 = vmatpush1.msra.mxu0 %v427
  %499 = vmatprep.subr.mxu0 0.0
  %500 = vmatpush1.msra.mxu0 %v428
  %501 = vmatprep.subr.mxu0 0.0
  %502 = vmatpush1.msra.mxu0 %v429
  %503 = vmatprep.subr.mxu0 0.0
  %504 = vmatpush1.msra.mxu0 %v430
  %505 = vmatprep.subr.mxu0 0.0
  %506 = vmatpush1.msra.mxu0 %v431
  %507 = vmatprep.subr.mxu0 0.0
  %508 = vmatpush1.msra.mxu0 %v432
  %509 = vmatprep.subr.mxu0 0.0
  %510 = vmatpush1.msra.mxu0 %v433
  %511 = vmatprep.subr.mxu0 0.0
  %512 = vmatpush1.msra.mxu0 %v434
  %513 = vmatprep.subr.mxu0 0.0
  %514 = vmatpush1.msra.mxu0 %v435
  %515 = vmatprep.subr.mxu0 0.0
  %516 = vmatpush1.msra.mxu0 %v436
  %517 = vmatprep.subr.mxu0 0.0
  %518 = vmatpush1.msra.mxu0 %v437
  %519 = vmatprep.subr.mxu0 0.0
  %520 = vmatpush1.msra.mxu0 %v438
  %521 = vmatprep.subr.mxu0 0.0
  %522 = vmatpush1.msra.mxu0 %v439
  %523 = vmatprep.subr.mxu0 0.0
  %524 = vmatpush1.msra.mxu0 %v440
  %525 = vmatprep.subr.mxu0 0.0
  %526 = vmatpush1.msra.mxu0 %v441
  %527 = vmatprep.subr.mxu0 0.0
  %528 = vmatpush1.msra.mxu0 %v442
  %529 = vmatprep.subr.mxu0 0.0
  %530 = vmatpush1.msra.mxu0 %v443
  %531 = vmatprep.subr.mxu0 0.0
  %532 = vmatpush1.msra.mxu0 %v444
  %533 = vmatprep.subr.mxu0 0.0
  %534 = vmatpush1.msra.mxu0 %v445
  %535 = vmatprep.subr.mxu0 0.0
  %536 = vmatpush1.msra.mxu0 %v446
  %537 = vmatprep.subr.mxu0 0.0
  %538 = vmatpush1.msra.mxu0 %v447
  %539 = vmatprep.subr.mxu0 0.0
  %540 = vmatpush1.msra.mxu0 %v448
  %541 = vmatprep.mubr.f32.mxu0 %v474
  %542 = vmatmul.mubr.f32.gmra.mrb[0].mxu0 %v473
  %v543 = vpop.f32.mrb[0].mxu0
  %v544 = vadd.f32 %v455, %v543
  %v545 = vpop.f32.mrb[0].mxu0
  %546 = vdwg.mxu0
  %v548 = vrot.slane %v282, 7
  %v551 = vrot.slane %v413, 6
  %v554 = vrot.slane %v544, 5
  %v557 = vrot.slane %v151, 5
  %v559 = vrot.slane %v282, 4
  %v561 = vrot.slane %v413, 3
  %v563 = vrot.slane %v544, 2
  %vm565 = vcmask 1040384
  %v566 = vsel %vm565, %v151, %v548
  %vm567 = vcmask 1041408
  %v568 = vsel %vm567, %v566, %v551
  %vm569 = vcmask 1042432
  %v570 = vsel %vm569, %v568, %v554
  %vm571 = vcmask 1043456
  %v572 = vsel %vm571, %v570, %v557
  %vm573 = vcmask 1044480
  %v574 = vsel %vm573, %v572, %v559
  %vm575 = vcmask 1045504
  %v576 = vsel %vm575, %v574, %v561
  %vm577 = vcmask 1046528
  %v578 = vsel %vm577, %v576, %v563
  %v579 = vld [vmem:[%s3] sm:$0xff]
  %v580 = vld [vmem:[%s3 + $0x8] sm:$0xff]
  %v581 = vld [vmem:[%s3 + $0x10] sm:$0xff]
  %v582 = vld [vmem:[%s3 + $0x18] sm:$0xff]
  %v583 = vld [vmem:[%s4] sm:$0x1]
  %v585 = vlaneseq
  %v586 = vshrl.u32 %v585, 7
  %v587 = vsub.s32 0, %v586
  %v588 = vrot.slane %v583, %v587
  %vm590 = vcmask 261120
  %v592 = vsel %vm590, %v578, 0
  %594 = vmatprep.subr.mxu0 0.0
  %595 = vmatpush1.msra.mxu0 %v579
  %596 = vmatprep.subr.mxu0 0.0
  %597 = vmatpush1.msra.mxu0 %v580
  %598 = vmatprep.subr.mxu0 0.0
  %599 = vmatpush1.msra.mxu0 %v581
  %600 = vmatprep.subr.mxu0 0.0
  %601 = vmatpush1.msra.mxu0 %v582
  %602 = vmatprep.subr.mxu0 0.0
  %603 = vmatpush1.msra.mxu0 0.0
  %604 = vmatprep.subr.mxu0 0.0
  %605 = vmatpush1.msra.mxu0 0.0
  %606 = vmatprep.subr.mxu0 0.0
  %607 = vmatpush1.msra.mxu0 0.0
  %608 = vmatprep.subr.mxu0 0.0
  %609 = vmatpush1.msra.mxu0 0.0
  %610 = vmatprep.subr.mxu0 0.0
  %611 = vmatpush1.msra.mxu0 0.0
  %612 = vmatprep.subr.mxu0 0.0
  %613 = vmatpush1.msra.mxu0 0.0
  %614 = vmatprep.subr.mxu0 0.0
  %615 = vmatpush1.msra.mxu0 0.0
  %616 = vmatprep.subr.mxu0 0.0
  %617 = vmatpush1.msra.mxu0 0.0
  %618 = vmatprep.subr.mxu0 0.0
  %619 = vmatpush1.msra.mxu0 0.0
  %620 = vmatprep.subr.mxu0 0.0
  %621 = vmatpush1.msra.mxu0 0.0
  %622 = vmatprep.subr.mxu0 0.0
  %623 = vmatpush1.msra.mxu0 0.0
  %624 = vmatprep.subr.mxu0 0.0
  %625 = vmatpush1.msra.mxu0 0.0
  %626 = vmatprep.subr.mxu0 0.0
  %627 = vmatpush1.msra.mxu0 0.0
  %628 = vmatprep.subr.mxu0 0.0
  %629 = vmatpush1.msra.mxu0 0.0
  %630 = vmatprep.subr.mxu0 0.0
  %631 = vmatpush1.msra.mxu0 0.0
  %632 = vmatprep.subr.mxu0 0.0
  %633 = vmatpush1.msra.mxu0 0.0
  %634 = vmatprep.subr.mxu0 0.0
  %635 = vmatpush1.msra.mxu0 0.0
  %636 = vmatprep.subr.mxu0 0.0
  %637 = vmatpush1.msra.mxu0 0.0
  %638 = vmatprep.subr.mxu0 0.0
  %639 = vmatpush1.msra.mxu0 0.0
  %640 = vmatprep.subr.mxu0 0.0
  %641 = vmatpush1.msra.mxu0 0.0
  %642 = vmatprep.subr.mxu0 0.0
  %643 = vmatpush1.msra.mxu0 0.0
  %644 = vmatprep.subr.mxu0 0.0
  %645 = vmatpush1.msra.mxu0 0.0
  %646 = vmatprep.subr.mxu0 0.0
  %647 = vmatpush1.msra.mxu0 0.0
  %648 = vmatprep.subr.mxu0 0.0
  %649 = vmatpush1.msra.mxu0 0.0
  %650 = vmatprep.subr.mxu0 0.0
  %651 = vmatpush1.msra.mxu0 0.0
  %652 = vmatprep.subr.mxu0 0.0
  %653 = vmatpush1.msra.mxu0 0.0
  %654 = vmatprep.subr.mxu0 0.0
  %655 = vmatpush1.msra.mxu0 0.0
  %656 = vmatprep.subr.mxu0 0.0
  %657 = vmatpush1.msra.mxu0 0.0
  %658 = vmatprep.mubr.f32.mxu0 0.0
  %659 = vmatmul.mubr.f32.gmra.mrb[0].mxu0 %v592
  %v660 = vpop.f32.mrb[0].mxu0
  %v661 = vadd.f32 %v588, %v660
  %v662 = vpop.f32.mrb[0].mxu0
  %663 = vdwg.mxu0
  %664 = vst [vmem:[%s5] sm:$0xff] %v661
  // Predicated region
  $region22: #{hypernetwork_forward.1} parent=0 // pred_check
    _
  $region23: #{hypernetwork_forward.1} parent=0 // pred_check_branch
    %666 = sbr.rel (0) target = $region25
  $region24: #{hypernetwork_forward.1} parent=0 // pred_region
    _
  $region25: #{hypernetwork_forward.1} parent=0 // pred_fallthru
    _
  // Predicated region
  $region26: #{hypernetwork_forward.1} parent=0 // pred_check
    _
  $region27: #{hypernetwork_forward.1} parent=0 // pred_check_branch
    %668 = sbr.rel (0) target = $region29
  $region28: #{hypernetwork_forward.1} parent=0 // pred_region
    _
  $region29: #{hypernetwork_forward.1} parent=0 // pred_fallthru
    _

</llo_original>
